<compile_context>
chip_gen: v5e
topology: v5e:2x2
jax: 0.10.0
libtpu: 0.0.40
codegen_flags: <defaults>
</compile_context>

<pallas_src>
import jax
import jax.numpy as jnp
from jax.experimental import pallas as pl
from jax.experimental.pallas import tpu as pltpu


E_PAD = 128  # lane-dense output width (multiple of the 128-lane vreg width)


# ----------------------------- Pallas kernel --------------------------------

def sim_gcn_fused_kernel(a_ref, x_ref, w1_ref, w2_ref, w3_ref, vec_ref, b3_ref,
                         o_ref):
    """Fused 3-layer SimGCN forward for the whole batch.

    a_ref   : (B*N, B*N)  block-diagonal normalized adjacency (I_B kron A_norm)
    x_ref   : (B*N, F)    node features of the whole PyG disjoint-union batch
    w1_ref  : (F, E)      layer-1 weight
    w2_ref  : (E, E)      layer-2 weight
    w3_ref  : (E, E_PAD)  layer-3 weight, zero-padded to 128 lanes
    vec_ref : (8, E)      packed per-layer vectors: rows = b1,g1,be1,b2,g2,be2,0,0
    b3_ref  : (1, E_PAD)  layer-3 bias, zero-padded to 128 lanes
    o_ref   : (B*N, E_PAD) lane-dense output; columns >= E are exactly zero.
    """
    a = a_ref[...]
    x = x_ref[...]
    vec = vec_ref[...]

    def bn(h, gamma, beta, eps=1e-5):
        # BatchNorm1d, training-mode batch statistics over all B*N rows.
        mean = jnp.mean(h, axis=0, keepdims=True)
        diff = h - mean
        var = jnp.mean(diff * diff, axis=0, keepdims=True)  # biased, as BN uses
        return diff * jax.lax.rsqrt(var + eps) * gamma + beta

    # --- layer 1: GCN -> ReLU -> BatchNorm ---
    h = jnp.dot(x, w1_ref[...], preferred_element_type=jnp.float32)
    h = jnp.dot(a, h, preferred_element_type=jnp.float32) + vec[0:1, :]
    h = jnp.maximum(h, 0.0)
    h = bn(h, vec[1:2, :], vec[2:3, :])

    # --- layer 2: GCN -> ReLU -> BatchNorm ---
    h = jnp.dot(h, w2_ref[...], preferred_element_type=jnp.float32)
    h = jnp.dot(a, h, preferred_element_type=jnp.float32) + vec[3:4, :]
    h = jnp.maximum(h, 0.0)
    h = bn(h, vec[4:5, :], vec[5:6, :])

    # --- layer 3: GCN -> ReLU (no BN); padded columns stay exactly zero ---
    h = jnp.dot(h, w3_ref[...], preferred_element_type=jnp.float32)
    h = jnp.dot(a, h, preferred_element_type=jnp.float32) + b3_ref[...]
    o_ref[...] = jnp.maximum(h, 0.0).astype(o_ref.dtype)


# ----------------------------- setup (hoisted, plain JAX) --------------------

def normalized_adjacency(edge_index, num_nodes):
    """Dense D^-1/2 (A + I) D^-1/2, matching PyG GCNConv default normalization.

    Rows = target, columns = source (PyG aggregates source -> target)."""
    src, dst = edge_index
    a = jnp.zeros((num_nodes, num_nodes), jnp.float32)
    # scatter-add so duplicate edges accumulate like PyG's scatter of edge weights
    a = a.at[dst, src].add(1.0)
    # TODO(synk): PyG's gcn_norm adds self-loop weight 1 regardless; `+ I` matches
    # that, but differs from add_remaining_self_loops when self-loops pre-exist.
    a_hat = a + jnp.eye(num_nodes, dtype=jnp.float32)
    deg = jnp.sum(a_hat, axis=1)
    d_inv_sqrt = jnp.where(deg > 0, jax.lax.rsqrt(deg), 0.0)
    return d_inv_sqrt[:, None] * a_hat * d_inv_sqrt[None, :]


def prepare_sim_gcn(edge_index, num_nodes, batch_size, params):
    """One-time setup hoisted out of the forward path: block-diagonal normalized
    adjacency over the batch, packed bias/BN vector table, lane padding."""
    E = params["w1"].shape[1]
    a_norm = normalized_adjacency(edge_index, num_nodes)              # (N, N)
    a_big = jnp.kron(jnp.eye(batch_size, dtype=jnp.float32), a_norm)  # (B*N, B*N)

    # Pack the six per-layer (E,) vectors into one sublane-aligned (8, E) table.
    vecs = jnp.zeros((8, E), jnp.float32)
    vecs = vecs.at[0].set(params["b1"])
    vecs = vecs.at[1].set(params["gamma1"])
    vecs = vecs.at[2].set(params["beta1"])
    vecs = vecs.at[3].set(params["b2"])
    vecs = vecs.at[4].set(params["gamma2"])
    vecs = vecs.at[5].set(params["beta2"])

    # Lane-pad the final layer so the kernel's only HBM store is unmasked.
    w3p = jnp.zeros((E, E_PAD), jnp.float32).at[:, :E].set(params["w3"])
    b3p = jnp.zeros((1, E_PAD), jnp.float32).at[:, :E].set(params["b3"])

    return dict(embedding_size=E, a_big=a_big,
                w1=params["w1"], w2=params["w2"], w3=w3p,
                vecs=vecs, b3=b3p)


# ----------------------------- forward (one pallas_call) ---------------------

def sim_gcn_forward(node_list, prep):
    """node_list: [B, N, F] per-graph node features (== PyG batch reshaped).
    Fixed graph_layers=3 structure (conv1/BN1, conv2/BN2, conv3)."""
    B, N, F = node_list.shape
    BN = B * N
    E = prep["embedding_size"]
    x = node_list.reshape(BN, F)

    vmem_spec = pl.BlockSpec(memory_space=pltpu.MemorySpace.VMEM)
    out_padded = pl.pallas_call(
        sim_gcn_fused_kernel,
        out_shape=jax.ShapeDtypeStruct((BN, E_PAD), jnp.float32),
        in_specs=[vmem_spec] * 7,
        out_specs=vmem_spec,
    )(prep["a_big"], x, prep["w1"], prep["w2"], prep["w3"],
      prep["vecs"], prep["b3"])

    # Strip lane padding, restore .view(true_batch_size, -1, out_channels).
    return out_padded[:, :E].reshape(B, N, E)


# ----------------------------- pure-JAX reference ----------------------------

def sim_gcn_reference(node_list, edge_index, params):
    B, N, F = node_list.shape
    a_norm = normalized_adjacency(edge_index, N)
    a_big = jnp.kron(jnp.eye(B, dtype=jnp.float32), a_norm)
    h = node_list.reshape(B * N, F)

    def gcn(h, w, b):
        return a_big @ (h @ w) + b[None, :]

    def bn(h, g, be):
        m = h.mean(0, keepdims=True)
        v = jnp.mean((h - m) ** 2, axis=0, keepdims=True)
        return (h - m) * jax.lax.rsqrt(v + 1e-5) * g[None, :] + be[None, :]

    h = bn(jnp.maximum(gcn(h, params["w1"], params["b1"]), 0.0),
           params["gamma1"], params["beta1"])
    h = bn(jnp.maximum(gcn(h, params["w2"], params["b2"]), 0.0),
           params["gamma2"], params["beta2"])
    h = jnp.maximum(gcn(h, params["w3"], params["b3"]), 0.0)
    return h.reshape(B, N, -1)


# ----------------------------- main ------------------------------------------

def glorot(key, shape):
    fan_in, fan_out = shape
    limit = jnp.sqrt(6.0 / (fan_in + fan_out))
    return jax.random.uniform(key, shape, jnp.float32, -limit, limit)


if __name__ == "__main__":
    # args: n_fapp=16, n_fpos=16 -> feature_size=32; graph_embedding_size=32;
    #       graph_layers=3; batch_size=2; 8 nodes per graph.
    B, N = 2, 8
    F = 16 + 16       # n_fapp + n_fpos
    E = 32            # graph_embedding_size

    key = jax.random.PRNGKey(0)
    ks = jax.random.split(key, 8)

    # TODO(synk): BatchNorm running-stat updates / eval() mode are not modeled;
    # only training-mode batch statistics (as the forward uses them) are implemented.
    params = {
        "w1": glorot(ks[0], (F, E)), "b1": jnp.zeros((E,), jnp.float32),
        "w2": glorot(ks[1], (E, E)), "b2": jnp.zeros((E,), jnp.float32),
        "w3": glorot(ks[2], (E, E)), "b3": jnp.zeros((E,), jnp.float32),
        "gamma1": jnp.ones((E,), jnp.float32), "beta1": jnp.zeros((E,), jnp.float32),
        "gamma2": jnp.ones((E,), jnp.float32), "beta2": jnp.zeros((E,), jnp.float32),
    }

    # node_list: B graphs, each with N nodes of F features.
    node_list = jax.random.normal(ks[3], (B, N, F), jnp.float32)

    # edge_index: undirected ring over N nodes, shape (2, 2N) like PyG.
    idx = jnp.arange(N)
    src = jnp.concatenate([idx, (idx + 1) % N])
    dst = jnp.concatenate([(idx + 1) % N, idx])
    edge_index = jnp.stack([src, dst], axis=0)

    # One-time setup (hoisted out of the forward path).
    prep = prepare_sim_gcn(edge_index, N, B, params)

    out = sim_gcn_forward(node_list, prep)
    out = jax.block_until_ready(out)

    assert out.shape == (B, N, E), out.shape
    assert bool(jnp.all(jnp.isfinite(out)))

    # Correctness vs. pure-JAX reference (tolerance for MXU f32 rounding).
    ref = sim_gcn_reference(node_list, edge_index, params)
    max_err = float(jnp.max(jnp.abs(out - ref)))
    assert max_err < 1e-2, f"mismatch vs reference: max_err={max_err}"

    print("KERNEL_OK")
</pallas_src>

<mosaic_0001>
module attributes {stable_mosaic.version = 11 : i64} {
  func.func @sim_gcn_fused_kernel(%arg0: memref<16x16xf32, #tpu.memory_space<vmem>>, %arg1: memref<16x32xf32, #tpu.memory_space<vmem>>, %arg2: memref<32x32xf32, #tpu.memory_space<vmem>>, %arg3: memref<32x32xf32, #tpu.memory_space<vmem>>, %arg4: memref<32x128xf32, #tpu.memory_space<vmem>>, %arg5: memref<8x32xf32, #tpu.memory_space<vmem>>, %arg6: memref<1x128xf32, #tpu.memory_space<vmem>>, %arg7: memref<16x128xf32, #tpu.memory_space<vmem>>) attributes {dimension_semantics = [], scalar_prefetch = 0 : i64, scratch_operands = 0 : i64, tpu.core_type = #tpu.core_type<tc>} {
    %c0 = arith.constant 0 : index
    %c0_0 = arith.constant 0 : index
    %0 = vector.load %arg0[%c0, %c0_0] : memref<16x16xf32, #tpu.memory_space<vmem>>, vector<16x16xf32>
    %c0_1 = arith.constant 0 : index
    %c0_2 = arith.constant 0 : index
    %1 = vector.load %arg1[%c0_1, %c0_2] : memref<16x32xf32, #tpu.memory_space<vmem>>, vector<16x32xf32>
    %c0_3 = arith.constant 0 : index
    %c0_4 = arith.constant 0 : index
    %2 = vector.load %arg5[%c0_3, %c0_4] : memref<8x32xf32, #tpu.memory_space<vmem>>, vector<8x32xf32>
    %c0_5 = arith.constant 0 : index
    %c0_6 = arith.constant 0 : index
    %3 = vector.load %arg2[%c0_5, %c0_6] : memref<32x32xf32, #tpu.memory_space<vmem>>, vector<32x32xf32>
    %cst = arith.constant dense<0.000000e+00> : vector<16x32xf32>
    %4 = tpu.matmul %1, %3, %cst {dimension_numbers = #tpu.dot_dimension_numbers<[1], [0], [0], [1], [0, 0, 1, 1], [], []>} : vector<16x32xf32>, vector<32x32xf32>, vector<16x32xf32> -> vector<16x32xf32>
    %cst_7 = arith.constant dense<0.000000e+00> : vector<16x32xf32>
    %5 = tpu.matmul %0, %4, %cst_7 {dimension_numbers = #tpu.dot_dimension_numbers<[1], [0], [0], [1], [0, 0, 1, 1], [], []>} : vector<16x16xf32>, vector<16x32xf32>, vector<16x32xf32> -> vector<16x32xf32>
    %6 = vector.extract_strided_slice %2 {offsets = [0, 0], sizes = [1, 32], strides = [1, 1]} : vector<8x32xf32> to vector<1x32xf32>
    %7 = vector.broadcast %6 : vector<1x32xf32> to vector<16x32xf32>
    %8 = arith.addf %5, %7 : vector<16x32xf32>
    %cst_8 = arith.constant 0.000000e+00 : f32
    %9 = vector.broadcast %cst_8 : f32 to vector<16x32xf32>
    %10 = arith.maximumf %8, %9 : vector<16x32xf32>
    %11 = vector.extract_strided_slice %2 {offsets = [1, 0], sizes = [1, 32], strides = [1, 1]} : vector<8x32xf32> to vector<1x32xf32>
    %12 = vector.extract_strided_slice %2 {offsets = [2, 0], sizes = [1, 32], strides = [1, 1]} : vector<8x32xf32> to vector<1x32xf32>
    %cst_9 = arith.constant dense<0.000000e+00> : vector<32xf32>
    %13 = vector.multi_reduction <add>, %10, %cst_9 [0] : vector<16x32xf32> to vector<32xf32>
    %14 = vector.shape_cast %13 : vector<32xf32> to vector<1x32xf32>
    %cst_10 = arith.constant 1.600000e+01 : f32
    %15 = vector.broadcast %cst_10 : f32 to vector<1x32xf32>
    %16 = arith.divf %14, %15 : vector<1x32xf32>
    %17 = vector.broadcast %16 : vector<1x32xf32> to vector<16x32xf32>
    %18 = arith.subf %10, %17 : vector<16x32xf32>
    %19 = arith.mulf %18, %18 : vector<16x32xf32>
    %cst_11 = arith.constant dense<0.000000e+00> : vector<32xf32>
    %20 = vector.multi_reduction <add>, %19, %cst_11 [0] : vector<16x32xf32> to vector<32xf32>
    %21 = vector.shape_cast %20 : vector<32xf32> to vector<1x32xf32>
    %cst_12 = arith.constant 1.600000e+01 : f32
    %22 = vector.broadcast %cst_12 : f32 to vector<1x32xf32>
    %23 = arith.divf %21, %22 : vector<1x32xf32>
    %cst_13 = arith.constant 9.99999974E-6 : f32
    %24 = vector.broadcast %cst_13 : f32 to vector<1x32xf32>
    %25 = arith.addf %23, %24 : vector<1x32xf32>
    %26 = math.rsqrt %25 : vector<1x32xf32>
    %27 = vector.broadcast %26 : vector<1x32xf32> to vector<16x32xf32>
    %28 = arith.mulf %18, %27 : vector<16x32xf32>
    %29 = vector.broadcast %11 : vector<1x32xf32> to vector<16x32xf32>
    %30 = arith.mulf %28, %29 : vector<16x32xf32>
    %31 = vector.broadcast %12 : vector<1x32xf32> to vector<16x32xf32>
    %32 = arith.addf %30, %31 : vector<16x32xf32>
    %c0_14 = arith.constant 0 : index
    %c0_15 = arith.constant 0 : index
    %33 = vector.load %arg3[%c0_14, %c0_15] : memref<32x32xf32, #tpu.memory_space<vmem>>, vector<32x32xf32>
    %cst_16 = arith.constant dense<0.000000e+00> : vector<16x32xf32>
    %34 = tpu.matmul %32, %33, %cst_16 {dimension_numbers = #tpu.dot_dimension_numbers<[1], [0], [0], [1], [0, 0, 1, 1], [], []>} : vector<16x32xf32>, vector<32x32xf32>, vector<16x32xf32> -> vector<16x32xf32>
    %cst_17 = arith.constant dense<0.000000e+00> : vector<16x32xf32>
    %35 = tpu.matmul %0, %34, %cst_17 {dimension_numbers = #tpu.dot_dimension_numbers<[1], [0], [0], [1], [0, 0, 1, 1], [], []>} : vector<16x16xf32>, vector<16x32xf32>, vector<16x32xf32> -> vector<16x32xf32>
    %36 = vector.extract_strided_slice %2 {offsets = [3, 0], sizes = [1, 32], strides = [1, 1]} : vector<8x32xf32> to vector<1x32xf32>
    %37 = vector.broadcast %36 : vector<1x32xf32> to vector<16x32xf32>
    %38 = arith.addf %35, %37 : vector<16x32xf32>
    %cst_18 = arith.constant 0.000000e+00 : f32
    %39 = vector.broadcast %cst_18 : f32 to vector<16x32xf32>
    %40 = arith.maximumf %38, %39 : vector<16x32xf32>
    %41 = vector.extract_strided_slice %2 {offsets = [4, 0], sizes = [1, 32], strides = [1, 1]} : vector<8x32xf32> to vector<1x32xf32>
    %42 = vector.extract_strided_slice %2 {offsets = [5, 0], sizes = [1, 32], strides = [1, 1]} : vector<8x32xf32> to vector<1x32xf32>
    %cst_19 = arith.constant dense<0.000000e+00> : vector<32xf32>
    %43 = vector.multi_reduction <add>, %40, %cst_19 [0] : vector<16x32xf32> to vector<32xf32>
    %44 = vector.shape_cast %43 : vector<32xf32> to vector<1x32xf32>
    %cst_20 = arith.constant 1.600000e+01 : f32
    %45 = vector.broadcast %cst_20 : f32 to vector<1x32xf32>
    %46 = arith.divf %44, %45 : vector<1x32xf32>
    %47 = vector.broadcast %46 : vector<1x32xf32> to vector<16x32xf32>
    %48 = arith.subf %40, %47 : vector<16x32xf32>
    %49 = arith.mulf %48, %48 : vector<16x32xf32>
    %cst_21 = arith.constant dense<0.000000e+00> : vector<32xf32>
    %50 = vector.multi_reduction <add>, %49, %cst_21 [0] : vector<16x32xf32> to vector<32xf32>
    %51 = vector.shape_cast %50 : vector<32xf32> to vector<1x32xf32>
    %cst_22 = arith.constant 1.600000e+01 : f32
    %52 = vector.broadcast %cst_22 : f32 to vector<1x32xf32>
    %53 = arith.divf %51, %52 : vector<1x32xf32>
    %cst_23 = arith.constant 9.99999974E-6 : f32
    %54 = vector.broadcast %cst_23 : f32 to vector<1x32xf32>
    %55 = arith.addf %53, %54 : vector<1x32xf32>
    %56 = math.rsqrt %55 : vector<1x32xf32>
    %57 = vector.broadcast %56 : vector<1x32xf32> to vector<16x32xf32>
    %58 = arith.mulf %48, %57 : vector<16x32xf32>
    %59 = vector.broadcast %41 : vector<1x32xf32> to vector<16x32xf32>
    %60 = arith.mulf %58, %59 : vector<16x32xf32>
    %61 = vector.broadcast %42 : vector<1x32xf32> to vector<16x32xf32>
    %62 = arith.addf %60, %61 : vector<16x32xf32>
    %c0_24 = arith.constant 0 : index
    %c0_25 = arith.constant 0 : index
    %63 = vector.load %arg4[%c0_24, %c0_25] : memref<32x128xf32, #tpu.memory_space<vmem>>, vector<32x128xf32>
    %cst_26 = arith.constant dense<0.000000e+00> : vector<16x128xf32>
    %64 = tpu.matmul %62, %63, %cst_26 {dimension_numbers = #tpu.dot_dimension_numbers<[1], [0], [0], [1], [0, 0, 1, 1], [], []>} : vector<16x32xf32>, vector<32x128xf32>, vector<16x128xf32> -> vector<16x128xf32>
    %cst_27 = arith.constant dense<0.000000e+00> : vector<16x128xf32>
    %65 = tpu.matmul %0, %64, %cst_27 {dimension_numbers = #tpu.dot_dimension_numbers<[1], [0], [0], [1], [0, 0, 1, 1], [], []>} : vector<16x16xf32>, vector<16x128xf32>, vector<16x128xf32> -> vector<16x128xf32>
    %c0_28 = arith.constant 0 : index
    %c0_29 = arith.constant 0 : index
    %66 = vector.load %arg6[%c0_28, %c0_29] : memref<1x128xf32, #tpu.memory_space<vmem>>, vector<1x128xf32>
    %67 = vector.broadcast %66 : vector<1x128xf32> to vector<16x128xf32>
    %68 = arith.addf %65, %67 : vector<16x128xf32>
    %cst_30 = arith.constant 0.000000e+00 : f32
    %69 = vector.broadcast %cst_30 : f32 to vector<16x128xf32>
    %70 = arith.maximumf %68, %69 : vector<16x128xf32>
    %c0_31 = arith.constant 0 : index
    %c0_32 = arith.constant 0 : index
    %71 = vector.load %arg7[%c0_31, %c0_32] : memref<16x128xf32, #tpu.memory_space<vmem>>, vector<16x128xf32>
    tpu.vector_store %arg7[%c0_31, %c0_32], %70 {strides = array<i32>} : memref<16x128xf32, #tpu.memory_space<vmem>>, vector<16x128xf32>,
    return
  }
}

</mosaic_0001>

<llo_original>
// kernel: tpu_custom_call.1
$region0: #{tpu_custom_call.1}
  #allocation0 [shape = 'u32[]', space=smem, size = 0x4, offset = 0x4, fixed_abs, tag = 'smem constant byte address 0x4 - core index']
  #allocation1 [shape = 'u32[72,128]{1,0:T(1,128)}', space=vmem, size = 0x9000, scoped, tag = 'internal scratch']
  %s0 = inlined_call_operand.hbm [shape: f32[16,16], index: 0, kind: input, shape index: {}]
  %s1 = inlined_call_operand.hbm [shape: f32[16,32], index: 1, kind: input, shape index: {}]
  %s2 = inlined_call_operand.hbm [shape: f32[32,32], index: 2, kind: input, shape index: {}]
  %s3 = inlined_call_operand.hbm [shape: f32[32,32], index: 3, kind: input, shape index: {}]
  %s4 = inlined_call_operand.hbm [shape: f32[32,128], index: 4, kind: input, shape index: {}]
  %s5 = inlined_call_operand.hbm [shape: f32[8,32], index: 5, kind: input, shape index: {}]
  %s6 = inlined_call_operand.vmem [shape: f32[1,128], index: 6, kind: input, shape index: {}]
  %s7 = inlined_call_operand.hbm [shape: f32[16,128], index: 7, kind: output, shape index: {}]
  %s8 = sld [smem:[#allocation0]]
  $region62: #{tpu_custom_call.1} parent=0
    _
  %s10 = ssub.s32 1, %s8
  %s11 = scalar_select 0, %s10, %s8
  $region1: #{tpu_custom_call.1} parent=0
    #allocation2 [shape = 'u8[8192]{0}', space=vmem, size = 0x2000, scoped, tag = 'input window, operand 0, single buffered']
    #allocation3 [shape = 's32[1]{0}', space=sflag, size = 0x4, scoped, tag = 'scoped memory for tpu_custom_call.1']
    #allocation4 [shape = 's32[1]{0}', space=sflag, size = 0x4, scoped, tag = 'scoped memory for tpu_custom_call.1']
    #allocation5 [shape = 'u8[8192]{0}', space=vmem, size = 0x2000, scoped, tag = 'input window, operand 1, single buffered']
    #allocation6 [shape = 's32[1]{0}', space=sflag, size = 0x4, scoped, tag = 'scoped memory for tpu_custom_call.1']
    #allocation7 [shape = 'u8[16384]{0}', space=vmem, size = 0x4000, scoped, tag = 'input window, operand 2, single buffered']
    #allocation8 [shape = 'u8[16384]{0}', space=vmem, size = 0x4000, scoped, tag = 'input window, operand 3, single buffered']
    #allocation9 [shape = 's32[1]{0}', space=sflag, size = 0x4, scoped, tag = 'scoped memory for tpu_custom_call.1']
    #allocation10 [shape = 'u8[16384]{0}', space=vmem, size = 0x4000, scoped, tag = 'input window, operand 4, single buffered']
    #allocation11 [shape = 'u8[4096]{0}', space=vmem, size = 0x1000, scoped, tag = 'input window, operand 5, single buffered']
    #allocation12 [shape = 's32[1]{0}', space=sflag, size = 0x4, scoped, tag = 'scoped memory for tpu_custom_call.1']
    #allocation13 [shape = 'u8[8192]{0}', space=vmem, size = 0x2000, scoped, tag = 'output window, operand 0, single buffered']
    %12 = vsyncpa [#allocation3], 0
    %13 = vsyncpa [#allocation6], 0
    %14 = vsyncpa [#allocation9], 0
    %15 = vsyncpa [#allocation12], 0
    %16 = vsyncpa [#allocation4], 0
    // Predicated region
    $region2: #{tpu_custom_call.1} parent=1 // pred_check
      _
    $region3: #{tpu_custom_call.1} parent=1 // pred_check_branch
      %18 = sbr.rel (0) target = $region5
    $region4: #{tpu_custom_call.1} parent=1 // pred_region
      %20 = vsyncadd [#allocation3], 0
      %s21 = sshll.u32 %s0, 4
      %s22 = int_to_ptr.hbm [resolvable:$true] %s21
      %s23 = sshll.u32 [#allocation2], 4
      %s24 = int_to_ptr.vmem [resolvable:$true] %s23
      %29 = dma.hbm_to_vmem [thread:$0]  %s22, 256, %s24, [#allocation3], 128, 128, 8
    $region5: #{tpu_custom_call.1} parent=1 // pred_fallthru
      _
    // Predicated region
    $region6: #{tpu_custom_call.1} parent=1 // pred_check
      _
    $region7: #{tpu_custom_call.1} parent=1 // pred_check_branch
      %31 = sbr.rel (0) target = $region9
    $region8: #{tpu_custom_call.1} parent=1 // pred_region
      %33 = vsyncadd [#allocation6], 0
      %s34 = sshll.u32 %s1, 4
      %s35 = int_to_ptr.hbm [resolvable:$true] %s34
      %s36 = sshll.u32 [#allocation5], 4
      %s37 = int_to_ptr.vmem [resolvable:$true] %s36
      %42 = dma.hbm_to_vmem [thread:$0]  %s35, 256, %s37, [#allocation6], 128, 128, 8
    $region9: #{tpu_custom_call.1} parent=1 // pred_fallthru
      _
    // Predicated region
    $region10: #{tpu_custom_call.1} parent=1 // pred_check
      _
    $region11: #{tpu_custom_call.1} parent=1 // pred_check_branch
      %44 = sbr.rel (0) target = $region13
    $region12: #{tpu_custom_call.1} parent=1 // pred_region
      %46 = vsyncadd [#allocation6], 0
      %s47 = sshll.u32 %s2, 4
      %s48 = int_to_ptr.hbm [resolvable:$true] %s47
      %s49 = sshll.u32 [#allocation7], 4
      %s50 = int_to_ptr.vmem [resolvable:$true] %s49
      %55 = dma.hbm_to_vmem [thread:$0]  %s48, 512, %s50, [#allocation6], 128, 128, 8
    $region13: #{tpu_custom_call.1} parent=1 // pred_fallthru
      _
    // Predicated region
    $region14: #{tpu_custom_call.1} parent=1 // pred_check
      _
    $region15: #{tpu_custom_call.1} parent=1 // pred_check_branch
      %57 = sbr.rel (0) target = $region17
    $region16: #{tpu_custom_call.1} parent=1 // pred_region
      %59 = vsyncadd [#allocation9], 0
      %s60 = sshll.u32 %s3, 4
      %s61 = int_to_ptr.hbm [resolvable:$true] %s60
      %s62 = sshll.u32 [#allocation8], 4
      %s63 = int_to_ptr.vmem [resolvable:$true] %s62
      %68 = dma.hbm_to_vmem [thread:$0]  %s61, 512, %s63, [#allocation9], 128, 128, 8
    $region17: #{tpu_custom_call.1} parent=1 // pred_fallthru
      _
    // Predicated region
    $region18: #{tpu_custom_call.1} parent=1 // pred_check
      _
    $region19: #{tpu_custom_call.1} parent=1 // pred_check_branch
      %70 = sbr.rel (0) target = $region21
    $region20: #{tpu_custom_call.1} parent=1 // pred_region
      %72 = vsyncadd [#allocation9], 0
      %s73 = sshll.u32 %s4, 4
      %s74 = int_to_ptr.hbm [resolvable:$true] %s73
      %s75 = sshll.u32 [#allocation10], 4
      %s76 = int_to_ptr.vmem [resolvable:$true] %s75
      %81 = dma.hbm_to_vmem [thread:$0]  %s74, 512, %s76, [#allocation9], 128, 128, 8
    $region21: #{tpu_custom_call.1} parent=1 // pred_fallthru
      _
    // Predicated region
    $region22: #{tpu_custom_call.1} parent=1 // pred_check
      _
    $region23: #{tpu_custom_call.1} parent=1 // pred_check_branch
      %83 = sbr.rel (0) target = $region25
    $region24: #{tpu_custom_call.1} parent=1 // pred_region
      %85 = vsyncadd [#allocation12], 0
      %s87 = sshll.u32 %s5, 4
      %s88 = int_to_ptr.hbm [resolvable:$true] %s87
      %s89 = sshll.u32 [#allocation11], 4
      %s90 = int_to_ptr.vmem [resolvable:$true] %s89
      %92 = dma.hbm_to_vmem [thread:$0]  %s88, 128, %s90, [#allocation12]
    $region25: #{tpu_custom_call.1} parent=1 // pred_fallthru
      _
    // Predicated region
    $region26: #{tpu_custom_call.1} parent=1 // pred_check
      _
    $region27: #{tpu_custom_call.1} parent=1 // pred_check_branch
      %94 = sbr.rel (0) target = $region29
    $region28: #{tpu_custom_call.1} parent=1 // pred_region
      _
    $region29: #{tpu_custom_call.1} parent=1 // pred_fallthru
      _
    // Predicated region
    $region30: #{tpu_custom_call.1} parent=1 // pred_check
      _
    $region31: #{tpu_custom_call.1} parent=1 // pred_check_branch
      %96 = sbr.rel (0) target = $region33
    $region32: #{tpu_custom_call.1} parent=1 // pred_region
      %98 = dma.done [#allocation3], 256
    $region33: #{tpu_custom_call.1} parent=1 // pred_fallthru
      _
    // Predicated region
    $region34: #{tpu_custom_call.1} parent=1 // pred_check
      _
    $region35: #{tpu_custom_call.1} parent=1 // pred_check_branch
      %100 = sbr.rel (0) target = $region37
    $region36: #{tpu_custom_call.1} parent=1 // pred_region
      %102 = dma.done [#allocation6], 256
    $region37: #{tpu_custom_call.1} parent=1 // pred_fallthru
      _
    // Predicated region
    $region38: #{tpu_custom_call.1} parent=1 // pred_check
      _
    $region39: #{tpu_custom_call.1} parent=1 // pred_check_branch
      %104 = sbr.rel (0) target = $region41
    $region40: #{tpu_custom_call.1} parent=1 // pred_region
      %106 = dma.done [#allocation6], 512
    $region41: #{tpu_custom_call.1} parent=1 // pred_fallthru
      _
    // Predicated region
    $region42: #{tpu_custom_call.1} parent=1 // pred_check
      _
    $region43: #{tpu_custom_call.1} parent=1 // pred_check_branch
      %108 = sbr.rel (0) target = $region45
    $region44: #{tpu_custom_call.1} parent=1 // pred_region
      %110 = dma.done [#allocation9], 512
    $region45: #{tpu_custom_call.1} parent=1 // pred_fallthru
      _
    // Predicated region
    $region46: #{tpu_custom_call.1} parent=1 // pred_check
      _
    $region47: #{tpu_custom_call.1} parent=1 // pred_check_branch
      %112 = sbr.rel (0) target = $region49
    $region48: #{tpu_custom_call.1} parent=1 // pred_region
      %114 = dma.done [#allocation9], 512
    $region49: #{tpu_custom_call.1} parent=1 // pred_fallthru
      _
    // Predicated region
    $region50: #{tpu_custom_call.1} parent=1 // pred_check
      _
    $region51: #{tpu_custom_call.1} parent=1 // pred_check_branch
      %116 = sbr.rel (0) target = $region53
    $region52: #{tpu_custom_call.1} parent=1 // pred_region
      %118 = dma.done [#allocation12], 128
    $region53: #{tpu_custom_call.1} parent=1 // pred_fallthru
      _
    %v119 = vld [vmem:[#allocation2] sm:$0xff]
    %v120 = vld [vmem:[#allocation2 + $0x8] sm:$0xff]
    %v121 = vld [vmem:[#allocation5] sm:$0xff]
    %v122 = vld [vmem:[#allocation5 + $0x8] sm:$0xff]
    %v123 = vld [vmem:[#allocation11] sm:$0xff]
    %v124 = vld [vmem:[#allocation7] sm:$0xff]
    %v125 = vld [vmem:[#allocation7 + $0x8] sm:$0xff]
    %v126 = vld [vmem:[#allocation7 + $0x10] sm:$0xff]
    %v127 = vld [vmem:[#allocation7 + $0x18] sm:$0xff]
    %vm128 = vcmask 261120
    %v130 = vsel %vm128, %v121, 0
    %v133 = vsel %vm128, %v122, 0
    %135 = vmatpush.msra.mxu0 0.0
    %136 = vmatpush.msra.mxu0 0.0
    %137 = vmatpush.msra.mxu0 0.0
    %138 = vmatpush.msra.mxu0 0.0
    %139 = vmatpush.msra.mxu0 0.0
    %140 = vmatpush.msra.mxu0 0.0
    %141 = vmatpush.msra.mxu0 0.0
    %142 = vmatpush.msra.mxu0 0.0
    %143 = vmatpush.msra.mxu0 0.0
    %144 = vmatpush.msra.mxu0 0.0
    %145 = vmatpush.msra.mxu0 0.0
    %146 = vmatpush.msra.mxu0 0.0
    %147 = vmatpush.msra.mxu0 %v127
    %148 = vmatpush.msra.mxu0 %v126
    %149 = vmatpush.msra.mxu0 %v125
    %150 = vmatpush.msra.mxu0 %v124
    %151 = vmatmul.f32.gmra.mxu0 %v130
    %v152 = vpop.f32.mrf.mxu0
    %v153 = vadd.f32 0.0, %v152
    %154 = vmatmul.f32.gmra.mxu0 %v133
    %v155 = vpop.f32.mrf.mxu0
    %v156 = vadd.f32 0.0, %v155
    %157 = vdwg.mxu0
    %v158 = vperm.slane %v123, 0
    %vm159 = vcmask 130048
    %v161 = vsel %vm159, %v119, 0
    %v164 = vsel %vm159, %v120, 0
    %166 = vmatpush.msra.mxu0 0.0
    %167 = vmatpush.msra.mxu0 0.0
    %168 = vmatpush.msra.mxu0 0.0
    %169 = vmatpush.msra.mxu0 0.0
    %170 = vmatpush.msra.mxu0 0.0
    %171 = vmatpush.msra.mxu0 0.0
    %172 = vmatpush.msra.mxu0 0.0
    %173 = vmatpush.msra.mxu0 0.0
    %174 = vmatpush.msra.mxu0 0.0
    %175 = vmatpush.msra.mxu0 0.0
    %176 = vmatpush.msra.mxu0 0.0
    %177 = vmatpush.msra.mxu0 0.0
    %178 = vmatpush.msra.mxu0 0.0
    %179 = vmatpush.msra.mxu0 0.0
    %180 = vmatpush.msra.mxu0 %v156
    %181 = vmatpush.msra.mxu0 %v153
    %182 = vmatmul.f32.gmra.mxu0 %v161
    %v183 = vpop.f32.mrf.mxu0
    %v184 = vadd.f32 %v158, %v183
    %185 = vmatmul.f32.gmra.mxu0 %v164
    %v186 = vpop.f32.mrf.mxu0
    %v187 = vadd.f32 %v158, %v186
    %188 = vdwg.mxu0
    %v189 = vmax.f32 %v184, 0.0
    %v190 = vmax.f32 %v187, 0.0
    %v191 = vsel %vm128, %v189, 0.0
    %v192 = vsel %vm128, %v190, 0.0
    %v193 = vadd.f32 %v191, %v192
    %v194 = vrot.slane %v193, 4
    %v195 = vadd.f32 %v193, %v194
    %v196 = vrot.slane %v195, 2
    %v197 = vadd.f32 %v195, %v196
    %v198 = vrot.slane %v197, 1
    %v199 = vadd.f32 %v197, %v198
    %v200 = vrcp.pop 16.0
    %v201 = vmul.f32 16.0, %v200
    %v202 = vsub.f32 1.0, %v201
    %v203 = vmul.f32 %v200, %v202
    %v204 = vadd.f32 %v200, %v203
    %vm205 = vweird.f32 %v200
    %v206 = vsel %vm205, %v200, %v204
    %v207 = vmul.f32 %v199, %v206
    %v208 = vsub.f32 %v189, %v207
    %v209 = vsub.f32 %v190, %v207
    %v210 = vmul.f32 %v208, %v208
    %v211 = vmul.f32 %v209, %v209
    %v212 = vsel %vm128, %v210, 0.0
    %v213 = vsel %vm128, %v211, 0.0
    %v214 = vadd.f32 %v212, %v213
    %v215 = vrot.slane %v214, 4
    %v216 = vadd.f32 %v214, %v215
    %v217 = vrot.slane %v216, 2
    %v218 = vadd.f32 %v216, %v217
    %v219 = vrot.slane %v218, 1
    %v220 = vadd.f32 %v218, %v219
    %v221 = vmul.f32 %v220, %v206
    %v222 = vadd.f32 %v221, 1e-05
    %v223 = vrsqrt.pop %v222
    %v224 = vmul.f32 %v223, %v222
    %v225 = vmul.f32 %v224, %v223
    %v226 = vmul.f32 0.5, %v225
    %v227 = vsub.f32 1.5, %v226
    %v228 = vmul.f32 %v223, %v227
    %vm229 = vweird.f32 %v222
    %vm230 = vweird.f32 %v223
    %vm231 = vmor %vm229, %vm230
    %v232 = vsel %vm231, %v223, %v228
    %v233 = vmul.f32 %v208, %v232
    %v234 = vmul.f32 %v209, %v232
    %v235 = vperm.slane %v123, 1
    %v236 = vmul.f32 %v233, %v235
    %v237 = vmul.f32 %v234, %v235
    %v238 = vperm.slane %v123, 2
    %v239 = vadd.f32 %v236, %v238
    %v240 = vadd.f32 %v237, %v238
    %v241 = vld [vmem:[#allocation8] sm:$0xff]
    %v242 = vld [vmem:[#allocation8 + $0x8] sm:$0xff]
    %v243 = vld [vmem:[#allocation8 + $0x10] sm:$0xff]
    %v244 = vld [vmem:[#allocation8 + $0x18] sm:$0xff]
    %v246 = vsel %vm128, %v239, 0
    %v249 = vsel %vm128, %v240, 0
    %251 = vmatpush.msra.mxu0 0.0
    %252 = vmatpush.msra.mxu0 0.0
    %253 = vmatpush.msra.mxu0 0.0
    %254 = vmatpush.msra.mxu0 0.0
    %255 = vmatpush.msra.mxu0 0.0
    %256 = vmatpush.msra.mxu0 0.0
    %257 = vmatpush.msra.mxu0 0.0
    %258 = vmatpush.msra.mxu0 0.0
    %259 = vmatpush.msra.mxu0 0.0
    %260 = vmatpush.msra.mxu0 0.0
    %261 = vmatpush.msra.mxu0 0.0
    %262 = vmatpush.msra.mxu0 0.0
    %263 = vmatpush.msra.mxu0 %v244
    %264 = vmatpush.msra.mxu0 %v243
    %265 = vmatpush.msra.mxu0 %v242
    %266 = vmatpush.msra.mxu0 %v241
    %267 = vmatmul.f32.gmra.mxu0 %v246
    %v268 = vpop.f32.mrf.mxu0
    %v269 = vadd.f32 0.0, %v268
    %270 = vmatmul.f32.gmra.mxu0 %v249
    %v271 = vpop.f32.mrf.mxu0
    %v272 = vadd.f32 0.0, %v271
    %273 = vdwg.mxu0
    %v274 = vperm.slane %v123, 3
    %275 = vmatpush.msra.mxu0 0.0
    %276 = vmatpush.msra.mxu0 0.0
    %277 = vmatpush.msra.mxu0 0.0
    %278 = vmatpush.msra.mxu0 0.0
    %279 = vmatpush.msra.mxu0 0.0
    %280 = vmatpush.msra.mxu0 0.0
    %281 = vmatpush.msra.mxu0 0.0
    %282 = vmatpush.msra.mxu0 0.0
    %283 = vmatpush.msra.mxu0 0.0
    %284 = vmatpush.msra.mxu0 0.0
    %285 = vmatpush.msra.mxu0 0.0
    %286 = vmatpush.msra.mxu0 0.0
    %287 = vmatpush.msra.mxu0 0.0
    %288 = vmatpush.msra.mxu0 0.0
    %289 = vmatpush.msra.mxu0 %v272
    %290 = vmatpush.msra.mxu0 %v269
    %291 = vmatmul.f32.gmra.mxu0 %v161
    %v292 = vpop.f32.mrf.mxu0
    %v293 = vadd.f32 %v274, %v292
    %294 = vmatmul.f32.gmra.mxu0 %v164
    %v295 = vpop.f32.mrf.mxu0
    %v296 = vadd.f32 %v274, %v295
    %297 = vdwg.mxu0
    %v298 = vmax.f32 %v293, 0.0
    %v299 = vmax.f32 %v296, 0.0
    %v300 = vsel %vm128, %v298, 0.0
    %v301 = vsel %vm128, %v299, 0.0
    %v302 = vadd.f32 %v300, %v301
    %v303 = vrot.slane %v302, 4
    %v304 = vadd.f32 %v302, %v303
    %v305 = vrot.slane %v304, 2
    %v306 = vadd.f32 %v304, %v305
    %v307 = vrot.slane %v306, 1
    %v308 = vadd.f32 %v306, %v307
    %v309 = vmul.f32 %v308, %v206
    %v310 = vsub.f32 %v298, %v309
    %v311 = vsub.f32 %v299, %v309
    %v312 = vmul.f32 %v310, %v310
    %v313 = vmul.f32 %v311, %v311
    %v314 = vsel %vm128, %v312, 0.0
    %v315 = vsel %vm128, %v313, 0.0
    %v316 = vadd.f32 %v314, %v315
    %v317 = vrot.slane %v316, 4
    %v318 = vadd.f32 %v316, %v317
    %v319 = vrot.slane %v318, 2
    %v320 = vadd.f32 %v318, %v319
    %v321 = vrot.slane %v320, 1
    %v322 = vadd.f32 %v320, %v321
    %v323 = vmul.f32 %v322, %v206
    %v324 = vadd.f32 %v323, 1e-05
    %v325 = vrsqrt.pop %v324
    %v326 = vmul.f32 %v325, %v324
    %v327 = vmul.f32 %v326, %v325
    %v328 = vmul.f32 0.5, %v327
    %v329 = vsub.f32 1.5, %v328
    %v330 = vmul.f32 %v325, %v329
    %vm331 = vweird.f32 %v324
    %vm332 = vweird.f32 %v325
    %vm333 = vmor %vm331, %vm332
    %v334 = vsel %vm333, %v325, %v330
    %v335 = vmul.f32 %v310, %v334
    %v336 = vmul.f32 %v311, %v334
    %v337 = vperm.slane %v123, 4
    %v338 = vmul.f32 %v335, %v337
    %v339 = vmul.f32 %v336, %v337
    %v340 = vperm.slane %v123, 5
    %v341 = vadd.f32 %v338, %v340
    %v342 = vadd.f32 %v339, %v340
    %v343 = vld [vmem:[#allocation10] sm:$0xff]
    %v344 = vld [vmem:[#allocation10 + $0x8] sm:$0xff]
    %v345 = vld [vmem:[#allocation10 + $0x10] sm:$0xff]
    %v346 = vld [vmem:[#allocation10 + $0x18] sm:$0xff]
    %v348 = vsel %vm128, %v341, 0
    %v351 = vsel %vm128, %v342, 0
    %353 = vmatpush.msra.mxu0 0.0
    %354 = vmatpush.msra.mxu0 0.0
    %355 = vmatpush.msra.mxu0 0.0
    %356 = vmatpush.msra.mxu0 0.0
    %357 = vmatpush.msra.mxu0 0.0
    %358 = vmatpush.msra.mxu0 0.0
    %359 = vmatpush.msra.mxu0 0.0
    %360 = vmatpush.msra.mxu0 0.0
    %361 = vmatpush.msra.mxu0 0.0
    %362 = vmatpush.msra.mxu0 0.0
    %363 = vmatpush.msra.mxu0 0.0
    %364 = vmatpush.msra.mxu0 0.0
    %365 = vmatpush.msra.mxu0 %v346
    %366 = vmatpush.msra.mxu0 %v345
    %367 = vmatpush.msra.mxu0 %v344
    %368 = vmatpush.msra.mxu0 %v343
    %369 = vmatmul.f32.gmra.mxu0 %v348
    %v370 = vpop.f32.mrf.mxu0
    %v371 = vadd.f32 0.0, %v370
    %372 = vmatmul.f32.gmra.mxu0 %v351
    %v373 = vpop.f32.mrf.mxu0
    %v374 = vadd.f32 0.0, %v373
    %375 = vdwg.mxu0
    %v376 = vld [vmem:[%s6] sm:$0x1]
    %v378 = vperm.slane %v376, 0
    %380 = vmatpush.msra.mxu0 0.0
    %381 = vmatpush.msra.mxu0 0.0
    %382 = vmatpush.msra.mxu0 0.0
    %383 = vmatpush.msra.mxu0 0.0
    %384 = vmatpush.msra.mxu0 0.0
    %385 = vmatpush.msra.mxu0 0.0
    %386 = vmatpush.msra.mxu0 0.0
    %387 = vmatpush.msra.mxu0 0.0
    %388 = vmatpush.msra.mxu0 0.0
    %389 = vmatpush.msra.mxu0 0.0
    %390 = vmatpush.msra.mxu0 0.0
    %391 = vmatpush.msra.mxu0 0.0
    %392 = vmatpush.msra.mxu0 0.0
    %393 = vmatpush.msra.mxu0 0.0
    %394 = vmatpush.msra.mxu0 %v374
    %395 = vmatpush.msra.mxu0 %v371
    %396 = vmatmul.f32.gmra.mxu0 %v161
    %v397 = vpop.f32.mrf.mxu0
    %v398 = vadd.f32 %v378, %v397
    %399 = vmatmul.f32.gmra.mxu0 %v164
    %v400 = vpop.f32.mrf.mxu0
    %v401 = vadd.f32 %v378, %v400
    %402 = vdwg.mxu0
    %v403 = vmax.f32 %v398, 0.0
    %v404 = vmax.f32 %v401, 0.0
    %405 = vst [vmem:[#allocation13] sm:$0xff] %v403
    %406 = vst [vmem:[#allocation13 + $0x8] sm:$0xff] %v404
    // Predicated region
    $region54: #{tpu_custom_call.1} parent=1 // pred_check
      _
    $region55: #{tpu_custom_call.1} parent=1 // pred_check_branch
      %408 = sbr.rel (0) target = $region57
    $region56: #{tpu_custom_call.1} parent=1 // pred_region
      %410 = vsyncadd [#allocation4], 0
      %s411 = sshll.u32 [#allocation13], 4
      %s412 = int_to_ptr.vmem [resolvable:$true] %s411
      %s413 = sshll.u32 %s7, 4
      %s414 = int_to_ptr.hbm [resolvable:$true] %s413
      %419 = dma.vmem_to_hbm [thread:$0]  %s412, 256, %s414, [#allocation4], 128, 128, 8
    $region57: #{tpu_custom_call.1} parent=1 // pred_fallthru
      _
    // Predicated region
    $region58: #{tpu_custom_call.1} parent=1 // pred_check
      _
    $region59: #{tpu_custom_call.1} parent=1 // pred_check_branch
      %421 = sbr.rel (0) target = $region61
    $region60: #{tpu_custom_call.1} parent=1 // pred_region
      %423 = dma.done [#allocation4], 256
    $region61: #{tpu_custom_call.1} parent=1 // pred_fallthru
      _
    %424 = vsyncpa [#allocation3], 1
    %425 = vsyncpa [#allocation6], 1
    %426 = vsyncpa [#allocation9], 1
    %427 = vsyncpa [#allocation12], 1
    %428 = vsyncpa [#allocation4], 1

</llo_original>
